<compile_context>
chip_gen: v7x
topology: tpu7x:2x2x1
jax: 0.10.0
libtpu: 0.0.40
codegen_flags: <defaults>
</compile_context>

<pallas_src>
import jax
import jax.numpy as jnp
from jax.experimental import pallas as pl
from jax.experimental.pallas import tpu as pltpu


def _round_up(x, m):
    return ((x + m - 1) // m) * m


def _approx_sigmoid(z):
    # sigmoid(z) = 1 / (1 + exp(-z)); exp and the approximate reciprocal both
    # execute on the EUP slot, leaving the VALU slot for relu/mul/add.
    return pl.reciprocal(1.0 + jnp.exp(-z), approx=True)


def _make_kernel(qk_half, mxu_dtype):
    def kernel(x_ref, wqk_ref, bqk_ref, wn_ref, bn_ref, wo_ref, bo_ref, o_ref):
        x = x_ref[...]                                    # (tile, P*D) f32

        # Fused packed Q|K projection: one MXU matmul.  Columns are laid out
        # [all Q lanes | all K lanes]; each half is vreg-aligned, so the Q+K
        # combine below is a plain vreg-vreg add (no XLU rotate).
        qk = (jnp.dot(x.astype(mxu_dtype), wqk_ref[...],
                      preferred_element_type=jnp.float32)
              + bqk_ref[...])
        qk = jnp.maximum(qk, 0.0)                         # relu(Q) | relu(K)
        attw = _approx_sigmoid(qk[:, :qk_half] + qk[:, qk_half:])

        out = attw * x                                    # V = x

        n = (jnp.dot(out.astype(mxu_dtype), wn_ref[...],
                     preferred_element_type=jnp.float32)
             + bn_ref[...])
        attw2 = _approx_sigmoid(jnp.maximum(n, 0.0))

        f2 = x + attw2 * out
        o_ref[...] = (jnp.dot(f2.astype(mxu_dtype), wo_ref[...],
                              preferred_element_type=jnp.float32)
                      + bo_ref[...]).astype(o_ref.dtype)

    return kernel


def attention_block_s(x, params, *, pack=8, max_tile_bp=2048,
                      mxu_dtype=jnp.float32):
    """x: (B, d_io) float32.  params: PyTorch-convention (out, in) weights.

    pack=8 packs 8 rows per lane group -> K=256 (fills v6e/v7x MXU depth) and a
    128-lane dense output (pack * d_out).  max_tile_bp is in *packed* rows;
    2048 packed rows (= 16384 original rows) keeps double-buffered VMEM well
    under v7x's budget; v5e/v6e (128 MiB VMEM) can raise it.
    """
    B, d_io = x.shape
    d_out = params["wo"].shape[0]       # rows of a PyTorch Linear weight

    # --- block-diagonal packed weights (host/XLA side, done once) ----------
    eye = jnp.eye(pack, dtype=jnp.float32)
    wq_bd = jnp.kron(eye, params["wq"].T)                      # (P*D, P*D)
    wk_bd = jnp.kron(eye, params["wk"].T)
    wqk_bd = jnp.concatenate([wq_bd, wk_bd], axis=1)           # (P*D, 2*P*D)
    wn_bd = jnp.kron(eye, params["wn"].T)                      # (P*D, P*D)
    wo_bd = jnp.kron(eye, params["wo"].T)                      # (P*D, P*d_out)

    bqk = jnp.concatenate([jnp.tile(params["bq"], pack),
                           jnp.tile(params["bk"], pack)])[None, :]
    bn = jnp.tile(params["bn"], pack)[None, :]
    bo = jnp.tile(params["bo"], pack)[None, :]

    wqk_bd = wqk_bd.astype(mxu_dtype)
    wn_bd = wn_bd.astype(mxu_dtype)
    wo_bd = wo_bd.astype(mxu_dtype)

    d_in_p = pack * d_io                 # packed feature lanes (256 here)
    d_out_p = pack * d_out               # packed output lanes (128 here)

    # --- tiling over packed rows -------------------------------------------
    bp_raw = pl.cdiv(B, pack)
    if bp_raw <= 8:
        tile_bp = bp_raw                 # single full-extent block (tiny batch)
    else:
        # >=2 grid steps so the "parallel" axis can shard across v7x's 2 TCs.
        tile_bp = min(max_tile_bp, _round_up(pl.cdiv(bp_raw, 2), 8))
    bp = _round_up(bp_raw, tile_bp)
    grid = (bp // tile_bp,)

    pad_rows = bp * pack - B
    xp = jnp.pad(x, ((0, pad_rows), (0, 0))) if pad_rows else x
    xp = xp.reshape(bp, d_in_p)

    # --- VMEM budget from sublane/lane-padded buffer shapes -----------------
    def _buf_bytes(rows, cols, itemsize=4):
        return itemsize * _round_up(max(rows, 1), 8) * _round_up(max(cols, 1), 128)

    w_item = jnp.dtype(mxu_dtype).itemsize
    weight_bytes = (_buf_bytes(*wqk_bd.shape, itemsize=w_item)
                    + _buf_bytes(1, 2 * d_in_p)
                    + _buf_bytes(*wn_bd.shape, itemsize=w_item)
                    + _buf_bytes(1, d_in_p)
                    + _buf_bytes(*wo_bd.shape, itemsize=w_item)
                    + _buf_bytes(1, d_out_p))
    tile_bytes = _buf_bytes(tile_bp, d_in_p) + _buf_bytes(tile_bp, d_out_p)
    vmem_limit = int(min(32 << 20, 2 * tile_bytes + 2 * weight_bytes + (4 << 20)))

    cost = pl.CostEstimate(
        flops=int(2 * bp * d_in_p * (3 * d_in_p + d_out_p)),
        transcendentals=int(2 * bp * d_in_p),
        bytes_accessed=int(4 * bp * (d_in_p + d_out_p) + weight_bytes),
    )

    full = lambda arr: pl.BlockSpec(arr.shape, lambda i: (0, 0))  # VMEM-resident

    y_packed = pl.pallas_call(
        _make_kernel(d_in_p, mxu_dtype),
        out_shape=jax.ShapeDtypeStruct((bp, d_out_p), jnp.float32),
        grid_spec=pltpu.PrefetchScalarGridSpec(
            num_scalar_prefetch=0,
            grid=grid,
            in_specs=[
                pl.BlockSpec((tile_bp, d_in_p), lambda i: (i, 0)),   # x (pipelined)
                full(wqk_bd), full(bqk),
                full(wn_bd), full(bn),
                full(wo_bd), full(bo),
            ],
            out_specs=pl.BlockSpec((tile_bp, d_out_p), lambda i: (i, 0)),
        ),
        compiler_params=pltpu.CompilerParams(
            dimension_semantics=("parallel",),   # shard batch steps across TCs
            vmem_limit_bytes=vmem_limit,
        ),
        cost_estimate=cost,
    )(xp, wqk_bd, bqk, wn_bd, bn, wo_bd, bo)

    # Unpack: packed row r, lane group g -> original row r*pack + g.
    return y_packed.reshape(bp * pack, d_out)[:B]


def reference(x, params):
    def lin(v, w, b):
        return v @ w.T + b
    q = jax.nn.relu(lin(x, params["wq"], params["bq"]))
    k = jax.nn.relu(lin(x, params["wk"], params["bk"]))
    attw = jax.nn.sigmoid(q + k)
    out = attw * x
    attw2 = jax.nn.sigmoid(jax.nn.relu(lin(out, params["wn"], params["bn"])))
    f2 = x + attw2 * out
    return lin(f2, params["wo"], params["bo"])


if __name__ == "__main__":
    # input_output_dim=32, input_dim=16 (output_linear: 32 -> 16).
    D_IO, D_IN = 32, 16

    key = jax.random.PRNGKey(0)
    ks = jax.random.split(key, 10)
    bound = 1.0 / jnp.sqrt(D_IO)
    params = {
        "wq": jax.random.uniform(ks[0], (D_IO, D_IO), jnp.float32, -bound, bound),
        "bq": jax.random.uniform(ks[1], (D_IO,), jnp.float32, -bound, bound),
        "wk": jax.random.uniform(ks[2], (D_IO, D_IO), jnp.float32, -bound, bound),
        "bk": jax.random.uniform(ks[3], (D_IO,), jnp.float32, -bound, bound),
        "wn": jax.random.uniform(ks[4], (D_IO, D_IO), jnp.float32, -bound, bound),
        "bn": jax.random.uniform(ks[5], (D_IO,), jnp.float32, -bound, bound),
        "wo": jax.random.uniform(ks[6], (D_IN, D_IO), jnp.float32, -bound, bound),
        "bo": jax.random.uniform(ks[7], (D_IN,), jnp.float32, -bound, bound),
    }

    # Tolerance is loosened slightly (vs. 1e-5) because the kernel uses the
    # EUP approximate-reciprocal sigmoid; everything else is exact f32 math.
    ATOL = RTOL = 5e-3

    # Two batch sizes: tiny (single grid step) and a ragged batch that
    # exercises zero-padding + a multi-step grid.
    for x_key, B in ((ks[8], 8), (ks[9], 200)):
        x = jax.random.normal(x_key, (B, D_IO), jnp.float32)
        y = jax.block_until_ready(attention_block_s(x, params))
        y_ref = reference(x, params)
        assert y.shape == (B, D_IN), y.shape
        assert jnp.allclose(y, y_ref, atol=ATOL, rtol=RTOL), (
            f"B={B} max abs err {jnp.max(jnp.abs(y - y_ref))}")

    print("KERNEL_OK")
</pallas_src>

<mosaic_0001>
module attributes {stable_mosaic.version = 11 : i64} {
  func.func @kernel(%arg0: i32, %arg1: memref<1x256xf32, #tpu.memory_space<vmem>>, %arg2: memref<256x512xf32, #tpu.memory_space<vmem>>, %arg3: memref<1x512xf32, #tpu.memory_space<vmem>>, %arg4: memref<256x256xf32, #tpu.memory_space<vmem>>, %arg5: memref<1x256xf32, #tpu.memory_space<vmem>>, %arg6: memref<256x128xf32, #tpu.memory_space<vmem>>, %arg7: memref<1x128xf32, #tpu.memory_space<vmem>>, %arg8: memref<1x128xf32, #tpu.memory_space<vmem>>) attributes {dimension_semantics = [#tpu.dimension_semantics<parallel>], iteration_bounds = array<i64: 1>, scalar_prefetch = 0 : i64, scratch_operands = 0 : i64, tpu.core_type = #tpu.core_type<tc>, window_params = [{transform_indices = @transform_0, window_bounds = array<i64: 1, 256>}, {pipeline_mode = #tpu.pipeline_mode<synchronous>, transform_indices = @transform_1, window_bounds = array<i64: 256, 512>}, {pipeline_mode = #tpu.pipeline_mode<synchronous>, transform_indices = @transform_2, window_bounds = array<i64: 1, 512>}, {pipeline_mode = #tpu.pipeline_mode<synchronous>, transform_indices = @transform_3, window_bounds = array<i64: 256, 256>}, {pipeline_mode = #tpu.pipeline_mode<synchronous>, transform_indices = @transform_4, window_bounds = array<i64: 1, 256>}, {pipeline_mode = #tpu.pipeline_mode<synchronous>, transform_indices = @transform_5, window_bounds = array<i64: 256, 128>}, {pipeline_mode = #tpu.pipeline_mode<synchronous>, transform_indices = @transform_6, window_bounds = array<i64: 1, 128>}, {transform_indices = @transform_7, window_bounds = array<i64: 1, 128>}]} {
    %c0 = arith.constant 0 : index
    %c0_0 = arith.constant 0 : index
    %0 = vector.load %arg1[%c0, %c0_0] : memref<1x256xf32, #tpu.memory_space<vmem>>, vector<1x256xf32>
    %c0_1 = arith.constant 0 : index
    %c0_2 = arith.constant 0 : index
    %1 = vector.load %arg2[%c0_1, %c0_2] : memref<256x512xf32, #tpu.memory_space<vmem>>, vector<256x512xf32>
    %cst = arith.constant dense<0.000000e+00> : vector<1x512xf32>
    %2 = tpu.matmul %0, %1, %cst {dimension_numbers = #tpu.dot_dimension_numbers<[1], [0], [0], [1], [0, 0, 1, 1], [], []>} : vector<1x256xf32>, vector<256x512xf32>, vector<1x512xf32> -> vector<1x512xf32>
    %c0_3 = arith.constant 0 : index
    %c0_4 = arith.constant 0 : index
    %3 = vector.load %arg3[%c0_3, %c0_4] : memref<1x512xf32, #tpu.memory_space<vmem>>, vector<1x512xf32>
    %4 = arith.addf %2, %3 : vector<1x512xf32>
    %cst_5 = arith.constant 0.000000e+00 : f32
    %5 = vector.broadcast %cst_5 : f32 to vector<1x512xf32>
    %6 = arith.maximumf %4, %5 : vector<1x512xf32>
    %7 = vector.extract_strided_slice %6 {offsets = [0, 0], sizes = [1, 256], strides = [1, 1]} : vector<1x512xf32> to vector<1x256xf32>
    %8 = vector.extract_strided_slice %6 {offsets = [0, 256], sizes = [1, 256], strides = [1, 1]} : vector<1x512xf32> to vector<1x256xf32>
    %9 = arith.addf %7, %8 : vector<1x256xf32>
    %cst_6 = arith.constant 0.000000e+00 : f32
    %10 = vector.broadcast %cst_6 : f32 to vector<1x256xf32>
    %11 = arith.subf %10, %9 : vector<1x256xf32>
    %12 = math.exp %11 : vector<1x256xf32>
    %cst_7 = arith.constant 1.000000e+00 : f32
    %13 = vector.broadcast %cst_7 : f32 to vector<1x256xf32>
    %14 = arith.addf %13, %12 : vector<1x256xf32>
    %15 = tpu.reciprocal %14 {approx = true} : vector<1x256xf32> -> vector<1x256xf32>
    %16 = arith.mulf %15, %0 : vector<1x256xf32>
    %c0_8 = arith.constant 0 : index
    %c0_9 = arith.constant 0 : index
    %17 = vector.load %arg4[%c0_8, %c0_9] : memref<256x256xf32, #tpu.memory_space<vmem>>, vector<256x256xf32>
    %cst_10 = arith.constant dense<0.000000e+00> : vector<1x256xf32>
    %18 = tpu.matmul %16, %17, %cst_10 {dimension_numbers = #tpu.dot_dimension_numbers<[1], [0], [0], [1], [0, 0, 1, 1], [], []>} : vector<1x256xf32>, vector<256x256xf32>, vector<1x256xf32> -> vector<1x256xf32>
    %c0_11 = arith.constant 0 : index
    %c0_12 = arith.constant 0 : index
    %19 = vector.load %arg5[%c0_11, %c0_12] : memref<1x256xf32, #tpu.memory_space<vmem>>, vector<1x256xf32>
    %20 = arith.addf %18, %19 : vector<1x256xf32>
    %cst_13 = arith.constant 0.000000e+00 : f32
    %21 = vector.broadcast %cst_13 : f32 to vector<1x256xf32>
    %22 = arith.maximumf %20, %21 : vector<1x256xf32>
    %cst_14 = arith.constant 0.000000e+00 : f32
    %23 = vector.broadcast %cst_14 : f32 to vector<1x256xf32>
    %24 = arith.subf %23, %22 : vector<1x256xf32>
    %25 = math.exp %24 : vector<1x256xf32>
    %cst_15 = arith.constant 1.000000e+00 : f32
    %26 = vector.broadcast %cst_15 : f32 to vector<1x256xf32>
    %27 = arith.addf %26, %25 : vector<1x256xf32>
    %28 = tpu.reciprocal %27 {approx = true} : vector<1x256xf32> -> vector<1x256xf32>
    %29 = arith.mulf %28, %16 : vector<1x256xf32>
    %30 = arith.addf %0, %29 : vector<1x256xf32>
    %c0_16 = arith.constant 0 : index
    %c0_17 = arith.constant 0 : index
    %31 = vector.load %arg6[%c0_16, %c0_17] : memref<256x128xf32, #tpu.memory_space<vmem>>, vector<256x128xf32>
    %cst_18 = arith.constant dense<0.000000e+00> : vector<1x128xf32>
    %32 = tpu.matmul %30, %31, %cst_18 {dimension_numbers = #tpu.dot_dimension_numbers<[1], [0], [0], [1], [0, 0, 1, 1], [], []>} : vector<1x256xf32>, vector<256x128xf32>, vector<1x128xf32> -> vector<1x128xf32>
    %c0_19 = arith.constant 0 : index
    %c0_20 = arith.constant 0 : index
    %33 = vector.load %arg7[%c0_19, %c0_20] : memref<1x128xf32, #tpu.memory_space<vmem>>, vector<1x128xf32>
    %34 = arith.addf %32, %33 : vector<1x128xf32>
    %c0_21 = arith.constant 0 : index
    %c0_22 = arith.constant 0 : index
    %35 = vector.load %arg8[%c0_21, %c0_22] : memref<1x128xf32, #tpu.memory_space<vmem>>, vector<1x128xf32>
    tpu.vector_store %arg8[%c0_21, %c0_22], %34 {strides = array<i32>} : memref<1x128xf32, #tpu.memory_space<vmem>>, vector<1x128xf32>,
    return
  }
  func.func @transform_0(%arg0: i32) -> (i32, i32) {
    %c0_i32 = arith.constant 0 : i32
    %c0_i32_0 = arith.constant 0 : i32
    return %arg0, %c0_i32 : i32, i32
  }
  func.func @transform_1(%arg0: i32) -> (i32, i32) {
    %c0_i32 = arith.constant 0 : i32
    %c0_i32_0 = arith.constant 0 : i32
    %c0_i32_1 = arith.constant 0 : i32
    return %c0_i32, %c0_i32_0 : i32, i32
  }
  func.func @transform_2(%arg0: i32) -> (i32, i32) {
    %c0_i32 = arith.constant 0 : i32
    %c0_i32_0 = arith.constant 0 : i32
    %c0_i32_1 = arith.constant 0 : i32
    return %c0_i32, %c0_i32_0 : i32, i32
  }
  func.func @transform_3(%arg0: i32) -> (i32, i32) {
    %c0_i32 = arith.constant 0 : i32
    %c0_i32_0 = arith.constant 0 : i32
    %c0_i32_1 = arith.constant 0 : i32
    return %c0_i32, %c0_i32_0 : i32, i32
  }
  func.func @transform_4(%arg0: i32) -> (i32, i32) {
    %c0_i32 = arith.constant 0 : i32
    %c0_i32_0 = arith.constant 0 : i32
    %c0_i32_1 = arith.constant 0 : i32
    return %c0_i32, %c0_i32_0 : i32, i32
  }
  func.func @transform_5(%arg0: i32) -> (i32, i32) {
    %c0_i32 = arith.constant 0 : i32
    %c0_i32_0 = arith.constant 0 : i32
    %c0_i32_1 = arith.constant 0 : i32
    return %c0_i32, %c0_i32_0 : i32, i32
  }
  func.func @transform_6(%arg0: i32) -> (i32, i32) {
    %c0_i32 = arith.constant 0 : i32
    %c0_i32_0 = arith.constant 0 : i32
    %c0_i32_1 = arith.constant 0 : i32
    return %c0_i32, %c0_i32_0 : i32, i32
  }
  func.func @transform_7(%arg0: i32) -> (i32, i32) {
    %c0_i32 = arith.constant 0 : i32
    %c0_i32_0 = arith.constant 0 : i32
    return %arg0, %c0_i32 : i32, i32
  }
}

</mosaic_0001>

<llo_original>
// kernel: tpu_custom_call.1
$region0: #{tpu_custom_call.1}
  #allocation0 [shape = 'u32[]', space=smem, size = 0x4, offset = 0x4, fixed_abs, tag = 'smem constant byte address 0x4 - core index']
  #allocation1 [shape = 'u32[144,128]{1,0:T(1,128)}', space=vmem, size = 0x12000, scoped, tag = 'internal scratch']
  %s0 = inlined_call_operand.hbm [shape: f32[1,256], index: 0, kind: input, shape index: {}]
  %s1 = inlined_call_operand.hbm [shape: f32[256,512], index: 1, kind: input, shape index: {}]
  %s2 = inlined_call_operand.vmem [shape: f32[1,512], index: 2, kind: input, shape index: {}]
  %s3 = inlined_call_operand.hbm [shape: f32[256,256], index: 3, kind: input, shape index: {}]
  %s4 = inlined_call_operand.vmem [shape: f32[1,256], index: 4, kind: input, shape index: {}]
  %s5 = inlined_call_operand.hbm [shape: f32[256,128], index: 5, kind: input, shape index: {}]
  %s6 = inlined_call_operand.vmem [shape: f32[1,128], index: 6, kind: input, shape index: {}]
  %s7 = inlined_call_operand.hbm [shape: f32[1,128], index: 7, kind: output, shape index: {}]
  %s8 = sld [smem:[#allocation0]]
  $region54: #{tpu_custom_call.1} parent=0
    _
  %s10 = ssub.s32 1, %s8
  %s11 = scalar_select 0, %s10, %s8
  $region1: #{tpu_custom_call.1} parent=0
    #allocation2 [shape = 'u8[1024]{0}', space=vmem, size = 0x400, scoped, tag = 'input window, operand 0, single buffered']
    #allocation3 [shape = 's32[1]{0}', space=sflag, size = 0x4, scoped, tag = 'scoped memory for tpu_custom_call.1']
    #allocation4 [shape = 's32[1]{0}', space=sflag, size = 0x4, scoped, tag = 'scoped memory for tpu_custom_call.1']
    #allocation5 [shape = 'u8[524288]{0}', space=vmem, size = 0x80000, scoped, tag = 'input window, operand 1, single buffered']
    #allocation6 [shape = 's32[1]{0}', space=sflag, size = 0x4, scoped, tag = 'scoped memory for tpu_custom_call.1']
    #allocation7 [shape = 'u8[262144]{0}', space=vmem, size = 0x40000, scoped, tag = 'input window, operand 3, single buffered']
    #allocation8 [shape = 'u8[131072]{0}', space=vmem, size = 0x20000, scoped, tag = 'input window, operand 5, single buffered']
    #allocation9 [shape = 's32[1]{0}', space=sflag, size = 0x4, scoped, tag = 'scoped memory for tpu_custom_call.1']
    #allocation10 [shape = 'u8[512]{0}', space=vmem, size = 0x400, scoped, tag = 'output window, operand 0, single buffered']
    %12 = vsyncpa [#allocation3], 0
    %13 = vsyncpa [#allocation6], 0
    %14 = vsyncpa [#allocation9], 0
    %15 = vsyncpa [#allocation4], 0
    // Predicated region
    $region2: #{tpu_custom_call.1} parent=1 // pred_check
      _
    $region3: #{tpu_custom_call.1} parent=1 // pred_check_branch
      %17 = sbr.rel (0) target = $region5
    $region4: #{tpu_custom_call.1} parent=1 // pred_region
      %s19 = ssub.s32 32, 32
      %20 = vsyncadd [#allocation3], %s19
      %s22 = sshll.u32 [#allocation2], 4
      %s23 = int_to_ptr.vmem [resolvable:$true] %s22
      %25 = dma.hbm_to_vmem [thread:$0]  %s0, 32, %s23, [#allocation3]
    $region5: #{tpu_custom_call.1} parent=1 // pred_fallthru
      _
    // Predicated region
    $region6: #{tpu_custom_call.1} parent=1 // pred_check
      _
    $region7: #{tpu_custom_call.1} parent=1 // pred_check_branch
      %27 = sbr.rel (0) target = $region9
    $region8: #{tpu_custom_call.1} parent=1 // pred_region
      %s29 = ssub.s32 16384, 16384
      %30 = vsyncadd [#allocation6], %s29
      %s31 = sshll.u32 [#allocation5], 4
      %s32 = int_to_ptr.vmem [resolvable:$true] %s31
      %37 = dma.hbm_to_vmem [thread:$0]  %s1, 16384, %s32, [#allocation6], 512, 512, 32
    $region9: #{tpu_custom_call.1} parent=1 // pred_fallthru
      _
    // Predicated region
    $region10: #{tpu_custom_call.1} parent=1 // pred_check
      _
    $region11: #{tpu_custom_call.1} parent=1 // pred_check_branch
      %39 = sbr.rel (0) target = $region13
    $region12: #{tpu_custom_call.1} parent=1 // pred_region
      _
    $region13: #{tpu_custom_call.1} parent=1 // pred_fallthru
      _
    // Predicated region
    $region14: #{tpu_custom_call.1} parent=1 // pred_check
      _
    $region15: #{tpu_custom_call.1} parent=1 // pred_check_branch
      %41 = sbr.rel (0) target = $region17
    $region16: #{tpu_custom_call.1} parent=1 // pred_region
      %s43 = ssub.s32 8192, 8192
      %44 = vsyncadd [#allocation6], %s43
      %s45 = sshll.u32 [#allocation7], 4
      %s46 = int_to_ptr.vmem [resolvable:$true] %s45
      %51 = dma.hbm_to_vmem [thread:$0]  %s3, 8192, %s46, [#allocation6], 256, 256, 16
    $region17: #{tpu_custom_call.1} parent=1 // pred_fallthru
      _
    // Predicated region
    $region18: #{tpu_custom_call.1} parent=1 // pred_check
      _
    $region19: #{tpu_custom_call.1} parent=1 // pred_check_branch
      %53 = sbr.rel (0) target = $region21
    $region20: #{tpu_custom_call.1} parent=1 // pred_region
      _
    $region21: #{tpu_custom_call.1} parent=1 // pred_fallthru
      _
    // Predicated region
    $region22: #{tpu_custom_call.1} parent=1 // pred_check
      _
    $region23: #{tpu_custom_call.1} parent=1 // pred_check_branch
      %55 = sbr.rel (0) target = $region25
    $region24: #{tpu_custom_call.1} parent=1 // pred_region
      %s57 = ssub.s32 4096, 4096
      %58 = vsyncadd [#allocation9], %s57
      %s59 = sshll.u32 [#allocation8], 4
      %s60 = int_to_ptr.vmem [resolvable:$true] %s59
      %65 = dma.hbm_to_vmem [thread:$0]  %s5, 4096, %s60, [#allocation9], 128, 128, 8
    $region25: #{tpu_custom_call.1} parent=1 // pred_fallthru
      _
    // Predicated region
    $region26: #{tpu_custom_call.1} parent=1 // pred_check
      _
    $region27: #{tpu_custom_call.1} parent=1 // pred_check_branch
      %67 = sbr.rel (0) target = $region29
    $region28: #{tpu_custom_call.1} parent=1 // pred_region
      _
    $region29: #{tpu_custom_call.1} parent=1 // pred_fallthru
      _
    // Predicated region
    $region30: #{tpu_custom_call.1} parent=1 // pred_check
      _
    $region31: #{tpu_custom_call.1} parent=1 // pred_check_branch
      %69 = sbr.rel (0) target = $region33
    $region32: #{tpu_custom_call.1} parent=1 // pred_region
      %70 = dma.done [#allocation3], 32
    $region33: #{tpu_custom_call.1} parent=1 // pred_fallthru
      _
    // Predicated region
    $region34: #{tpu_custom_call.1} parent=1 // pred_check
      _
    $region35: #{tpu_custom_call.1} parent=1 // pred_check_branch
      %72 = sbr.rel (0) target = $region37
    $region36: #{tpu_custom_call.1} parent=1 // pred_region
      %73 = dma.done [#allocation6], 16384
    $region37: #{tpu_custom_call.1} parent=1 // pred_fallthru
      _
    // Predicated region
    $region38: #{tpu_custom_call.1} parent=1 // pred_check
      _
    $region39: #{tpu_custom_call.1} parent=1 // pred_check_branch
      %75 = sbr.rel (0) target = $region41
    $region40: #{tpu_custom_call.1} parent=1 // pred_region
      %76 = dma.done [#allocation6], 8192
    $region41: #{tpu_custom_call.1} parent=1 // pred_fallthru
      _
    // Predicated region
    $region42: #{tpu_custom_call.1} parent=1 // pred_check
      _
    $region43: #{tpu_custom_call.1} parent=1 // pred_check_branch
      %78 = sbr.rel (0) target = $region45
    $region44: #{tpu_custom_call.1} parent=1 // pred_region
      %79 = dma.done [#allocation9], 4096
    $region45: #{tpu_custom_call.1} parent=1 // pred_fallthru
      _
    %v80 = vld [vmem:[#allocation2] sm:$0x3]
    %v81 = vld [vmem:[#allocation5] sm:$0xff]
    %v82 = vld [vmem:[#allocation5 + $0x8] sm:$0xff]
    %v83 = vld [vmem:[#allocation5 + $0x10] sm:$0xff]
    %v84 = vld [vmem:[#allocation5 + $0x18] sm:$0xff]
    %v85 = vld [vmem:[#allocation5 + $0x20] sm:$0xff]
    %v86 = vld [vmem:[#allocation5 + $0x28] sm:$0xff]
    %v87 = vld [vmem:[#allocation5 + $0x30] sm:$0xff]
    %v88 = vld [vmem:[#allocation5 + $0x38] sm:$0xff]
    %v89 = vld [vmem:[#allocation5 + $0x40] sm:$0xff]
    %v90 = vld [vmem:[#allocation5 + $0x48] sm:$0xff]
    %v91 = vld [vmem:[#allocation5 + $0x50] sm:$0xff]
    %v92 = vld [vmem:[#allocation5 + $0x58] sm:$0xff]
    %v93 = vld [vmem:[#allocation5 + $0x60] sm:$0xff]
    %v94 = vld [vmem:[#allocation5 + $0x68] sm:$0xff]
    %v95 = vld [vmem:[#allocation5 + $0x70] sm:$0xff]
    %v96 = vld [vmem:[#allocation5 + $0x78] sm:$0xff]
    %v97 = vld [vmem:[#allocation5 + $0x80] sm:$0xff]
    %v98 = vld [vmem:[#allocation5 + $0x88] sm:$0xff]
    %v99 = vld [vmem:[#allocation5 + $0x90] sm:$0xff]
    %v100 = vld [vmem:[#allocation5 + $0x98] sm:$0xff]
    %v101 = vld [vmem:[#allocation5 + $0xa0] sm:$0xff]
    %v102 = vld [vmem:[#allocation5 + $0xa8] sm:$0xff]
    %v103 = vld [vmem:[#allocation5 + $0xb0] sm:$0xff]
    %v104 = vld [vmem:[#allocation5 + $0xb8] sm:$0xff]
    %v105 = vld [vmem:[#allocation5 + $0xc0] sm:$0xff]
    %v106 = vld [vmem:[#allocation5 + $0xc8] sm:$0xff]
    %v107 = vld [vmem:[#allocation5 + $0xd0] sm:$0xff]
    %v108 = vld [vmem:[#allocation5 + $0xd8] sm:$0xff]
    %v109 = vld [vmem:[#allocation5 + $0xe0] sm:$0xff]
    %v110 = vld [vmem:[#allocation5 + $0xe8] sm:$0xff]
    %v111 = vld [vmem:[#allocation5 + $0xf0] sm:$0xff]
    %v112 = vld [vmem:[#allocation5 + $0xf8] sm:$0xff]
    %v113 = vld [vmem:[#allocation5 + $0x100] sm:$0xff]
    %v114 = vld [vmem:[#allocation5 + $0x108] sm:$0xff]
    %v115 = vld [vmem:[#allocation5 + $0x110] sm:$0xff]
    %v116 = vld [vmem:[#allocation5 + $0x118] sm:$0xff]
    %v117 = vld [vmem:[#allocation5 + $0x120] sm:$0xff]
    %v118 = vld [vmem:[#allocation5 + $0x128] sm:$0xff]
    %v119 = vld [vmem:[#allocation5 + $0x130] sm:$0xff]
    %v120 = vld [vmem:[#allocation5 + $0x138] sm:$0xff]
    %v121 = vld [vmem:[#allocation5 + $0x140] sm:$0xff]
    %v122 = vld [vmem:[#allocation5 + $0x148] sm:$0xff]
    %v123 = vld [vmem:[#allocation5 + $0x150] sm:$0xff]
    %v124 = vld [vmem:[#allocation5 + $0x158] sm:$0xff]
    %v125 = vld [vmem:[#allocation5 + $0x160] sm:$0xff]
    %v126 = vld [vmem:[#allocation5 + $0x168] sm:$0xff]
    %v127 = vld [vmem:[#allocation5 + $0x170] sm:$0xff]
    %v128 = vld [vmem:[#allocation5 + $0x178] sm:$0xff]
    %v129 = vld [vmem:[#allocation5 + $0x180] sm:$0xff]
    %v130 = vld [vmem:[#allocation5 + $0x188] sm:$0xff]
    %v131 = vld [vmem:[#allocation5 + $0x190] sm:$0xff]
    %v132 = vld [vmem:[#allocation5 + $0x198] sm:$0xff]
    %v133 = vld [vmem:[#allocation5 + $0x1a0] sm:$0xff]
    %v134 = vld [vmem:[#allocation5 + $0x1a8] sm:$0xff]
    %v135 = vld [vmem:[#allocation5 + $0x1b0] sm:$0xff]
    %v136 = vld [vmem:[#allocation5 + $0x1b8] sm:$0xff]
    %v137 = vld [vmem:[#allocation5 + $0x1c0] sm:$0xff]
    %v138 = vld [vmem:[#allocation5 + $0x1c8] sm:$0xff]
    %v139 = vld [vmem:[#allocation5 + $0x1d0] sm:$0xff]
    %v140 = vld [vmem:[#allocation5 + $0x1d8] sm:$0xff]
    %v141 = vld [vmem:[#allocation5 + $0x1e0] sm:$0xff]
    %v142 = vld [vmem:[#allocation5 + $0x1e8] sm:$0xff]
    %v143 = vld [vmem:[#allocation5 + $0x1f0] sm:$0xff]
    %v144 = vld [vmem:[#allocation5 + $0x1f8] sm:$0xff]
    %v145 = vld [vmem:[#allocation5 + $0x200] sm:$0xff]
    %v146 = vld [vmem:[#allocation5 + $0x208] sm:$0xff]
    %v147 = vld [vmem:[#allocation5 + $0x210] sm:$0xff]
    %v148 = vld [vmem:[#allocation5 + $0x218] sm:$0xff]
    %v149 = vld [vmem:[#allocation5 + $0x220] sm:$0xff]
    %v150 = vld [vmem:[#allocation5 + $0x228] sm:$0xff]
    %v151 = vld [vmem:[#allocation5 + $0x230] sm:$0xff]
    %v152 = vld [vmem:[#allocation5 + $0x238] sm:$0xff]
    %v153 = vld [vmem:[#allocation5 + $0x240] sm:$0xff]
    %v154 = vld [vmem:[#allocation5 + $0x248] sm:$0xff]
    %v155 = vld [vmem:[#allocation5 + $0x250] sm:$0xff]
    %v156 = vld [vmem:[#allocation5 + $0x258] sm:$0xff]
    %v157 = vld [vmem:[#allocation5 + $0x260] sm:$0xff]
    %v158 = vld [vmem:[#allocation5 + $0x268] sm:$0xff]
    %v159 = vld [vmem:[#allocation5 + $0x270] sm:$0xff]
    %v160 = vld [vmem:[#allocation5 + $0x278] sm:$0xff]
    %v161 = vld [vmem:[#allocation5 + $0x280] sm:$0xff]
    %v162 = vld [vmem:[#allocation5 + $0x288] sm:$0xff]
    %v163 = vld [vmem:[#allocation5 + $0x290] sm:$0xff]
    %v164 = vld [vmem:[#allocation5 + $0x298] sm:$0xff]
    %v165 = vld [vmem:[#allocation5 + $0x2a0] sm:$0xff]
    %v166 = vld [vmem:[#allocation5 + $0x2a8] sm:$0xff]
    %v167 = vld [vmem:[#allocation5 + $0x2b0] sm:$0xff]
    %v168 = vld [vmem:[#allocation5 + $0x2b8] sm:$0xff]
    %v169 = vld [vmem:[#allocation5 + $0x2c0] sm:$0xff]
    %v170 = vld [vmem:[#allocation5 + $0x2c8] sm:$0xff]
    %v171 = vld [vmem:[#allocation5 + $0x2d0] sm:$0xff]
    %v172 = vld [vmem:[#allocation5 + $0x2d8] sm:$0xff]
    %v173 = vld [vmem:[#allocation5 + $0x2e0] sm:$0xff]
    %v174 = vld [vmem:[#allocation5 + $0x2e8] sm:$0xff]
    %v175 = vld [vmem:[#allocation5 + $0x2f0] sm:$0xff]
    %v176 = vld [vmem:[#allocation5 + $0x2f8] sm:$0xff]
    %v177 = vld [vmem:[#allocation5 + $0x300] sm:$0xff]
    %v178 = vld [vmem:[#allocation5 + $0x308] sm:$0xff]
    %v179 = vld [vmem:[#allocation5 + $0x310] sm:$0xff]
    %v180 = vld [vmem:[#allocation5 + $0x318] sm:$0xff]
    %v181 = vld [vmem:[#allocation5 + $0x320] sm:$0xff]
    %v182 = vld [vmem:[#allocation5 + $0x328] sm:$0xff]
    %v183 = vld [vmem:[#allocation5 + $0x330] sm:$0xff]
    %v184 = vld [vmem:[#allocation5 + $0x338] sm:$0xff]
    %v185 = vld [vmem:[#allocation5 + $0x340] sm:$0xff]
    %v186 = vld [vmem:[#allocation5 + $0x348] sm:$0xff]
    %v187 = vld [vmem:[#allocation5 + $0x350] sm:$0xff]
    %v188 = vld [vmem:[#allocation5 + $0x358] sm:$0xff]
    %v189 = vld [vmem:[#allocation5 + $0x360] sm:$0xff]
    %v190 = vld [vmem:[#allocation5 + $0x368] sm:$0xff]
    %v191 = vld [vmem:[#allocation5 + $0x370] sm:$0xff]
    %v192 = vld [vmem:[#allocation5 + $0x378] sm:$0xff]
    %v193 = vld [vmem:[#allocation5 + $0x380] sm:$0xff]
    %v194 = vld [vmem:[#allocation5 + $0x388] sm:$0xff]
    %v195 = vld [vmem:[#allocation5 + $0x390] sm:$0xff]
    %v196 = vld [vmem:[#allocation5 + $0x398] sm:$0xff]
    %v197 = vld [vmem:[#allocation5 + $0x3a0] sm:$0xff]
    %v198 = vld [vmem:[#allocation5 + $0x3a8] sm:$0xff]
    %v199 = vld [vmem:[#allocation5 + $0x3b0] sm:$0xff]
    %v200 = vld [vmem:[#allocation5 + $0x3b8] sm:$0xff]
    %v201 = vld [vmem:[#allocation5 + $0x3c0] sm:$0xff]
    %v202 = vld [vmem:[#allocation5 + $0x3c8] sm:$0xff]
    %v203 = vld [vmem:[#allocation5 + $0x3d0] sm:$0xff]
    %v204 = vld [vmem:[#allocation5 + $0x3d8] sm:$0xff]
    %v205 = vld [vmem:[#allocation5 + $0x3e0] sm:$0xff]
    %v206 = vld [vmem:[#allocation5 + $0x3e8] sm:$0xff]
    %v207 = vld [vmem:[#allocation5 + $0x3f0] sm:$0xff]
    %v208 = vld [vmem:[#allocation5 + $0x3f8] sm:$0xff]
    %v209 = vld [vmem:[%s2] sm:$0xf]
    %v211 = vlaneseq
    %v212 = vshrl.u32 %v211, 7
    %v213 = vsub.s32 0, %v212
    %v214 = vrot.slane %v80, %v213
    %v215 = vlaneseq
    %v216 = vshrl.u32 %v215, 7
    %v217 = vsub.s32 1, %v216
    %v218 = vrot.slane %v80, %v217
    %v222 = vlaneseq
    %v223 = vshrl.u32 %v222, 7
    %v224 = vsub.s32 0, %v223
    %v225 = vrot.slane %v209, %v224
    %v226 = vlaneseq
    %v227 = vshrl.u32 %v226, 7
    %v228 = vsub.s32 1, %v227
    %v229 = vrot.slane %v209, %v228
    %v230 = vlaneseq
    %v231 = vshrl.u32 %v230, 7
    %v232 = vsub.s32 2, %v231
    %v233 = vrot.slane %v209, %v232
    %v234 = vlaneseq
    %v235 = vshrl.u32 %v234, 7
    %v236 = vsub.s32 3, %v235
    %v237 = vrot.slane %v209, %v236
    %242 = vmatprep.subr.mxu0 %v82
    %243 = vmatpush1.msra.mxu0 %v81
    %244 = vmatprep.subr.mxu0 %v86
    %245 = vmatpush1.msra.mxu0 %v85
    %246 = vmatprep.subr.mxu0 %v90
    %247 = vmatpush1.msra.mxu0 %v89
    %248 = vmatprep.subr.mxu0 %v94
    %249 = vmatpush1.msra.mxu0 %v93
    %250 = vmatprep.subr.mxu0 %v98
    %251 = vmatpush1.msra.mxu0 %v97
    %252 = vmatprep.subr.mxu0 %v102
    %253 = vmatpush1.msra.mxu0 %v101
    %254 = vmatprep.subr.mxu0 %v106
    %255 = vmatpush1.msra.mxu0 %v105
    %256 = vmatprep.subr.mxu0 %v110
    %257 = vmatpush1.msra.mxu0 %v109
    %258 = vmatprep.subr.mxu0 %v114
    %259 = vmatpush1.msra.mxu0 %v113
    %260 = vmatprep.subr.mxu0 %v118
    %261 = vmatpush1.msra.mxu0 %v117
    %262 = vmatprep.subr.mxu0 %v122
    %263 = vmatpush1.msra.mxu0 %v121
    %264 = vmatprep.subr.mxu0 %v126
    %265 = vmatpush1.msra.mxu0 %v125
    %266 = vmatprep.subr.mxu0 %v130
    %267 = vmatpush1.msra.mxu0 %v129
    %268 = vmatprep.subr.mxu0 %v134
    %269 = vmatpush1.msra.mxu0 %v133
    %270 = vmatprep.subr.mxu0 %v138
    %271 = vmatpush1.msra.mxu0 %v137
    %272 = vmatprep.subr.mxu0 %v142
    %273 = vmatpush1.msra.mxu0 %v141
    %274 = vmatprep.subr.mxu0 %v146
    %275 = vmatpush1.msra.mxu0 %v145
    %276 = vmatprep.subr.mxu0 %v150
    %277 = vmatpush1.msra.mxu0 %v149
    %278 = vmatprep.subr.mxu0 %v154
    %279 = vmatpush1.msra.mxu0 %v153
    %280 = vmatprep.subr.mxu0 %v158
    %281 = vmatpush1.msra.mxu0 %v157
    %282 = vmatprep.subr.mxu0 %v162
    %283 = vmatpush1.msra.mxu0 %v161
    %284 = vmatprep.subr.mxu0 %v166
    %285 = vmatpush1.msra.mxu0 %v165
    %286 = vmatprep.subr.mxu0 %v170
    %287 = vmatpush1.msra.mxu0 %v169
    %288 = vmatprep.subr.mxu0 %v174
    %289 = vmatpush1.msra.mxu0 %v173
    %290 = vmatprep.subr.mxu0 %v178
    %291 = vmatpush1.msra.mxu0 %v177
    %292 = vmatprep.subr.mxu0 %v182
    %293 = vmatpush1.msra.mxu0 %v181
    %294 = vmatprep.subr.mxu0 %v186
    %295 = vmatpush1.msra.mxu0 %v185
    %296 = vmatprep.subr.mxu0 %v190
    %297 = vmatpush1.msra.mxu0 %v189
    %298 = vmatprep.subr.mxu0 %v194
    %299 = vmatpush1.msra.mxu0 %v193
    %300 = vmatprep.subr.mxu0 %v198
    %301 = vmatpush1.msra.mxu0 %v197
    %302 = vmatprep.subr.mxu0 %v202
    %303 = vmatpush1.msra.mxu0 %v201
    %304 = vmatprep.subr.mxu0 %v206
    %305 = vmatpush1.msra.mxu0 %v205
    %306 = vmatprep.mubr.f32.mxu0 %v218
    %307 = vmatmul.mubr.f32.gmra.mrb[0].mxu0 %v214
    %v308 = vpop.f32.mrb[0].mxu0
    %v309 = vadd.f32 %v225, %v308
    %v310 = vpop.f32.mrb[0].mxu0
    %v311 = vadd.f32 %v229, %v310
    %312 = vdwg.mxu0
    %313 = vmatprep.subr.mxu0 %v84
    %314 = vmatpush1.msra.mxu0 %v83
    %315 = vmatprep.subr.mxu0 %v88
    %316 = vmatpush1.msra.mxu0 %v87
    %317 = vmatprep.subr.mxu0 %v92
    %318 = vmatpush1.msra.mxu0 %v91
    %319 = vmatprep.subr.mxu0 %v96
    %320 = vmatpush1.msra.mxu0 %v95
    %321 = vmatprep.subr.mxu0 %v100
    %322 = vmatpush1.msra.mxu0 %v99
    %323 = vmatprep.subr.mxu0 %v104
    %324 = vmatpush1.msra.mxu0 %v103
    %325 = vmatprep.subr.mxu0 %v108
    %326 = vmatpush1.msra.mxu0 %v107
    %327 = vmatprep.subr.mxu0 %v112
    %328 = vmatpush1.msra.mxu0 %v111
    %329 = vmatprep.subr.mxu0 %v116
    %330 = vmatpush1.msra.mxu0 %v115
    %331 = vmatprep.subr.mxu0 %v120
    %332 = vmatpush1.msra.mxu0 %v119
    %333 = vmatprep.subr.mxu0 %v124
    %334 = vmatpush1.msra.mxu0 %v123
    %335 = vmatprep.subr.mxu0 %v128
    %336 = vmatpush1.msra.mxu0 %v127
    %337 = vmatprep.subr.mxu0 %v132
    %338 = vmatpush1.msra.mxu0 %v131
    %339 = vmatprep.subr.mxu0 %v136
    %340 = vmatpush1.msra.mxu0 %v135
    %341 = vmatprep.subr.mxu0 %v140
    %342 = vmatpush1.msra.mxu0 %v139
    %343 = vmatprep.subr.mxu0 %v144
    %344 = vmatpush1.msra.mxu0 %v143
    %345 = vmatprep.subr.mxu0 %v148
    %346 = vmatpush1.msra.mxu0 %v147
    %347 = vmatprep.subr.mxu0 %v152
    %348 = vmatpush1.msra.mxu0 %v151
    %349 = vmatprep.subr.mxu0 %v156
    %350 = vmatpush1.msra.mxu0 %v155
    %351 = vmatprep.subr.mxu0 %v160
    %352 = vmatpush1.msra.mxu0 %v159
    %353 = vmatprep.subr.mxu0 %v164
    %354 = vmatpush1.msra.mxu0 %v163
    %355 = vmatprep.subr.mxu0 %v168
    %356 = vmatpush1.msra.mxu0 %v167
    %357 = vmatprep.subr.mxu0 %v172
    %358 = vmatpush1.msra.mxu0 %v171
    %359 = vmatprep.subr.mxu0 %v176
    %360 = vmatpush1.msra.mxu0 %v175
    %361 = vmatprep.subr.mxu0 %v180
    %362 = vmatpush1.msra.mxu0 %v179
    %363 = vmatprep.subr.mxu0 %v184
    %364 = vmatpush1.msra.mxu0 %v183
    %365 = vmatprep.subr.mxu0 %v188
    %366 = vmatpush1.msra.mxu0 %v187
    %367 = vmatprep.subr.mxu0 %v192
    %368 = vmatpush1.msra.mxu0 %v191
    %369 = vmatprep.subr.mxu0 %v196
    %370 = vmatpush1.msra.mxu0 %v195
    %371 = vmatprep.subr.mxu0 %v200
    %372 = vmatpush1.msra.mxu0 %v199
    %373 = vmatprep.subr.mxu0 %v204
    %374 = vmatpush1.msra.mxu0 %v203
    %375 = vmatprep.subr.mxu0 %v208
    %376 = vmatpush1.msra.mxu0 %v207
    %377 = vmatprep.mubr.f32.mxu0 %v218
    %378 = vmatmul.mubr.f32.gmra.mrb[0].mxu0 %v214
    %v379 = vpop.f32.mrb[0].mxu0
    %v380 = vadd.f32 %v233, %v379
    %v381 = vpop.f32.mrb[0].mxu0
    %v382 = vadd.f32 %v237, %v381
    %383 = vdwg.mxu0
    %v384 = vmax.f32 %v309, 0.0
    %v385 = vmax.f32 %v311, 0.0
    %v386 = vmax.f32 %v380, 0.0
    %v387 = vmax.f32 %v382, 0.0
    %v388 = vadd.f32 %v384, %v386
    %v389 = vadd.f32 %v385, %v387
    %v390 = vsub.f32 0.0, %v388
    %v391 = vsub.f32 0.0, %v389
    %v392 = vmul.f32 %v390, 1.442695
    %v393 = vpow.pop %v392
    %v394 = vmul.f32 %v391, 1.442695
    %v395 = vpow.pop %v394
    %v396 = vadd.f32 %v393, 1.0
    %v397 = vadd.f32 %v395, 1.0
    %v398 = vrcp.pop %v396
    %v399 = vrcp.pop %v397
    %v400 = vmul.f32 %v398, %v214
    %v401 = vmul.f32 %v399, %v218
    %v402 = vld [vmem:[#allocation7] sm:$0xff]
    %v403 = vld [vmem:[#allocation7 + $0x8] sm:$0xff]
    %v404 = vld [vmem:[#allocation7 + $0x10] sm:$0xff]
    %v405 = vld [vmem:[#allocation7 + $0x18] sm:$0xff]
    %v406 = vld [vmem:[#allocation7 + $0x20] sm:$0xff]
    %v407 = vld [vmem:[#allocation7 + $0x28] sm:$0xff]
    %v408 = vld [vmem:[#allocation7 + $0x30] sm:$0xff]
    %v409 = vld [vmem:[#allocation7 + $0x38] sm:$0xff]
    %v410 = vld [vmem:[#allocation7 + $0x40] sm:$0xff]
    %v411 = vld [vmem:[#allocation7 + $0x48] sm:$0xff]
    %v412 = vld [vmem:[#allocation7 + $0x50] sm:$0xff]
    %v413 = vld [vmem:[#allocation7 + $0x58] sm:$0xff]
    %v414 = vld [vmem:[#allocation7 + $0x60] sm:$0xff]
    %v415 = vld [vmem:[#allocation7 + $0x68] sm:$0xff]
    %v416 = vld [vmem:[#allocation7 + $0x70] sm:$0xff]
    %v417 = vld [vmem:[#allocation7 + $0x78] sm:$0xff]
    %v418 = vld [vmem:[#allocation7 + $0x80] sm:$0xff]
    %v419 = vld [vmem:[#allocation7 + $0x88] sm:$0xff]
    %v420 = vld [vmem:[#allocation7 + $0x90] sm:$0xff]
    %v421 = vld [vmem:[#allocation7 + $0x98] sm:$0xff]
    %v422 = vld [vmem:[#allocation7 + $0xa0] sm:$0xff]
    %v423 = vld [vmem:[#allocation7 + $0xa8] sm:$0xff]
    %v424 = vld [vmem:[#allocation7 + $0xb0] sm:$0xff]
    %v425 = vld [vmem:[#allocation7 + $0xb8] sm:$0xff]
    %v426 = vld [vmem:[#allocation7 + $0xc0] sm:$0xff]
    %v427 = vld [vmem:[#allocation7 + $0xc8] sm:$0xff]
    %v428 = vld [vmem:[#allocation7 + $0xd0] sm:$0xff]
    %v429 = vld [vmem:[#allocation7 + $0xd8] sm:$0xff]
    %v430 = vld [vmem:[#allocation7 + $0xe0] sm:$0xff]
    %v431 = vld [vmem:[#allocation7 + $0xe8] sm:$0xff]
    %v432 = vld [vmem:[#allocation7 + $0xf0] sm:$0xff]
    %v433 = vld [vmem:[#allocation7 + $0xf8] sm:$0xff]
    %v434 = vld [vmem:[#allocation7 + $0x100] sm:$0xff]
    %v435 = vld [vmem:[#allocation7 + $0x108] sm:$0xff]
    %v436 = vld [vmem:[#allocation7 + $0x110] sm:$0xff]
    %v437 = vld [vmem:[#allocation7 + $0x118] sm:$0xff]
    %v438 = vld [vmem:[#allocation7 + $0x120] sm:$0xff]
    %v439 = vld [vmem:[#allocation7 + $0x128] sm:$0xff]
    %v440 = vld [vmem:[#allocation7 + $0x130] sm:$0xff]
    %v441 = vld [vmem:[#allocation7 + $0x138] sm:$0xff]
    %v442 = vld [vmem:[#allocation7 + $0x140] sm:$0xff]
    %v443 = vld [vmem:[#allocation7 + $0x148] sm:$0xff]
    %v444 = vld [vmem:[#allocation7 + $0x150] sm:$0xff]
    %v445 = vld [vmem:[#allocation7 + $0x158] sm:$0xff]
    %v446 = vld [vmem:[#allocation7 + $0x160] sm:$0xff]
    %v447 = vld [vmem:[#allocation7 + $0x168] sm:$0xff]
    %v448 = vld [vmem:[#allocation7 + $0x170] sm:$0xff]
    %v449 = vld [vmem:[#allocation7 + $0x178] sm:$0xff]
    %v450 = vld [vmem:[#allocation7 + $0x180] sm:$0xff]
    %v451 = vld [vmem:[#allocation7 + $0x188] sm:$0xff]
    %v452 = vld [vmem:[#allocation7 + $0x190] sm:$0xff]
    %v453 = vld [vmem:[#allocation7 + $0x198] sm:$0xff]
    %v454 = vld [vmem:[#allocation7 + $0x1a0] sm:$0xff]
    %v455 = vld [vmem:[#allocation7 + $0x1a8] sm:$0xff]
    %v456 = vld [vmem:[#allocation7 + $0x1b0] sm:$0xff]
    %v457 = vld [vmem:[#allocation7 + $0x1b8] sm:$0xff]
    %v458 = vld [vmem:[#allocation7 + $0x1c0] sm:$0xff]
    %v459 = vld [vmem:[#allocation7 + $0x1c8] sm:$0xff]
    %v460 = vld [vmem:[#allocation7 + $0x1d0] sm:$0xff]
    %v461 = vld [vmem:[#allocation7 + $0x1d8] sm:$0xff]
    %v462 = vld [vmem:[#allocation7 + $0x1e0] sm:$0xff]
    %v463 = vld [vmem:[#allocation7 + $0x1e8] sm:$0xff]
    %v464 = vld [vmem:[#allocation7 + $0x1f0] sm:$0xff]
    %v465 = vld [vmem:[#allocation7 + $0x1f8] sm:$0xff]
    %v466 = vld [vmem:[%s4] sm:$0x3]
    %v468 = vlaneseq
    %v469 = vshrl.u32 %v468, 7
    %v470 = vsub.s32 0, %v469
    %v471 = vrot.slane %v466, %v470
    %v472 = vlaneseq
    %v473 = vshrl.u32 %v472, 7
    %v474 = vsub.s32 1, %v473
    %v475 = vrot.slane %v466, %v474
    %478 = vmatprep.subr.mxu0 %v403
    %479 = vmatpush1.msra.mxu0 %v402
    %480 = vmatprep.subr.mxu0 %v405
    %481 = vmatpush1.msra.mxu0 %v404
    %482 = vmatprep.subr.mxu0 %v407
    %483 = vmatpush1.msra.mxu0 %v406
    %484 = vmatprep.subr.mxu0 %v409
    %485 = vmatpush1.msra.mxu0 %v408
    %486 = vmatprep.subr.mxu0 %v411
    %487 = vmatpush1.msra.mxu0 %v410
    %488 = vmatprep.subr.mxu0 %v413
    %489 = vmatpush1.msra.mxu0 %v412
    %490 = vmatprep.subr.mxu0 %v415
    %491 = vmatpush1.msra.mxu0 %v414
    %492 = vmatprep.subr.mxu0 %v417
    %493 = vmatpush1.msra.mxu0 %v416
    %494 = vmatprep.subr.mxu0 %v419
    %495 = vmatpush1.msra.mxu0 %v418
    %496 = vmatprep.subr.mxu0 %v421
    %497 = vmatpush1.msra.mxu0 %v420
    %498 = vmatprep.subr.mxu0 %v423
    %499 = vmatpush1.msra.mxu0 %v422
    %500 = vmatprep.subr.mxu0 %v425
    %501 = vmatpush1.msra.mxu0 %v424
    %502 = vmatprep.subr.mxu0 %v427
    %503 = vmatpush1.msra.mxu0 %v426
    %504 = vmatprep.subr.mxu0 %v429
    %505 = vmatpush1.msra.mxu0 %v428
    %506 = vmatprep.subr.mxu0 %v431
    %507 = vmatpush1.msra.mxu0 %v430
    %508 = vmatprep.subr.mxu0 %v433
    %509 = vmatpush1.msra.mxu0 %v432
    %510 = vmatprep.subr.mxu0 %v435
    %511 = vmatpush1.msra.mxu0 %v434
    %512 = vmatprep.subr.mxu0 %v437
    %513 = vmatpush1.msra.mxu0 %v436
    %514 = vmatprep.subr.mxu0 %v439
    %515 = vmatpush1.msra.mxu0 %v438
    %516 = vmatprep.subr.mxu0 %v441
    %517 = vmatpush1.msra.mxu0 %v440
    %518 = vmatprep.subr.mxu0 %v443
    %519 = vmatpush1.msra.mxu0 %v442
    %520 = vmatprep.subr.mxu0 %v445
    %521 = vmatpush1.msra.mxu0 %v444
    %522 = vmatprep.subr.mxu0 %v447
    %523 = vmatpush1.msra.mxu0 %v446
    %524 = vmatprep.subr.mxu0 %v449
    %525 = vmatpush1.msra.mxu0 %v448
    %526 = vmatprep.subr.mxu0 %v451
    %527 = vmatpush1.msra.mxu0 %v450
    %528 = vmatprep.subr.mxu0 %v453
    %529 = vmatpush1.msra.mxu0 %v452
    %530 = vmatprep.subr.mxu0 %v455
    %531 = vmatpush1.msra.mxu0 %v454
    %532 = vmatprep.subr.mxu0 %v457
    %533 = vmatpush1.msra.mxu0 %v456
    %534 = vmatprep.subr.mxu0 %v459
    %535 = vmatpush1.msra.mxu0 %v458
    %536 = vmatprep.subr.mxu0 %v461
    %537 = vmatpush1.msra.mxu0 %v460
    %538 = vmatprep.subr.mxu0 %v463
    %539 = vmatpush1.msra.mxu0 %v462
    %540 = vmatprep.subr.mxu0 %v465
    %541 = vmatpush1.msra.mxu0 %v464
    %542 = vmatprep.mubr.f32.mxu0 %v401
    %543 = vmatmul.mubr.f32.gmra.mrb[0].mxu0 %v400
    %v544 = vpop.f32.mrb[0].mxu0
    %v545 = vadd.f32 %v471, %v544
    %v546 = vpop.f32.mrb[0].mxu0
    %v547 = vadd.f32 %v475, %v546
    %548 = vdwg.mxu0
    %v549 = vmax.f32 %v545, 0.0
    %v550 = vmax.f32 %v547, 0.0
    %v551 = vsub.f32 0.0, %v549
    %v552 = vsub.f32 0.0, %v550
    %v553 = vmul.f32 %v551, 1.442695
    %v554 = vpow.pop %v553
    %v555 = vmul.f32 %v552, 1.442695
    %v556 = vpow.pop %v555
    %v557 = vadd.f32 %v554, 1.0
    %v558 = vadd.f32 %v556, 1.0
    %v559 = vrcp.pop %v557
    %v560 = vrcp.pop %v558
    %v561 = vmul.f32 %v559, %v400
    %v562 = vmul.f32 %v560, %v401
    %v565 = vcombine.low %v561, %v562
    %v567 = vunpack.c.l.s4 1966171168
    %v568 = vunpack.c.0.s8 %v567
    %v569 = vlaneseq
    %v570 = vshrl.u32 %v569, 7
    %v571 = vsub.s32 %v568, %v570
    %v572 = vrot.slane %v565, %v571
    %v574 = vunpack.c.l.s4 1966171168
    %v575 = vunpack.c.0.s8 %v574
    %v576 = vlaneseq
    %v577 = vshrl.u32 %v576, 7
    %v578 = vsub.s32 %v575, %v577
    %v579 = vrot.slane %v572, %v578
    %v581 = vadd.f32 %v80, %v579
    %v582 = vld [vmem:[#allocation8] sm:$0xff]
    %v583 = vld [vmem:[#allocation8 + $0x8] sm:$0xff]
    %v584 = vld [vmem:[#allocation8 + $0x10] sm:$0xff]
    %v585 = vld [vmem:[#allocation8 + $0x18] sm:$0xff]
    %v586 = vld [vmem:[#allocation8 + $0x20] sm:$0xff]
    %v587 = vld [vmem:[#allocation8 + $0x28] sm:$0xff]
    %v588 = vld [vmem:[#allocation8 + $0x30] sm:$0xff]
    %v589 = vld [vmem:[#allocation8 + $0x38] sm:$0xff]
    %v590 = vld [vmem:[#allocation8 + $0x40] sm:$0xff]
    %v591 = vld [vmem:[#allocation8 + $0x48] sm:$0xff]
    %v592 = vld [vmem:[#allocation8 + $0x50] sm:$0xff]
    %v593 = vld [vmem:[#allocation8 + $0x58] sm:$0xff]
    %v594 = vld [vmem:[#allocation8 + $0x60] sm:$0xff]
    %v595 = vld [vmem:[#allocation8 + $0x68] sm:$0xff]
    %v596 = vld [vmem:[#allocation8 + $0x70] sm:$0xff]
    %v597 = vld [vmem:[#allocation8 + $0x78] sm:$0xff]
    %v598 = vld [vmem:[#allocation8 + $0x80] sm:$0xff]
    %v599 = vld [vmem:[#allocation8 + $0x88] sm:$0xff]
    %v600 = vld [vmem:[#allocation8 + $0x90] sm:$0xff]
    %v601 = vld [vmem:[#allocation8 + $0x98] sm:$0xff]
    %v602 = vld [vmem:[#allocation8 + $0xa0] sm:$0xff]
    %v603 = vld [vmem:[#allocation8 + $0xa8] sm:$0xff]
    %v604 = vld [vmem:[#allocation8 + $0xb0] sm:$0xff]
    %v605 = vld [vmem:[#allocation8 + $0xb8] sm:$0xff]
    %v606 = vld [vmem:[#allocation8 + $0xc0] sm:$0xff]
    %v607 = vld [vmem:[#allocation8 + $0xc8] sm:$0xff]
    %v608 = vld [vmem:[#allocation8 + $0xd0] sm:$0xff]
    %v609 = vld [vmem:[#allocation8 + $0xd8] sm:$0xff]
    %v610 = vld [vmem:[#allocation8 + $0xe0] sm:$0xff]
    %v611 = vld [vmem:[#allocation8 + $0xe8] sm:$0xff]
    %v612 = vld [vmem:[#allocation8 + $0xf0] sm:$0xff]
    %v613 = vld [vmem:[#allocation8 + $0xf8] sm:$0xff]
    %v614 = vld [vmem:[%s6] sm:$0x1]
    %v616 = vlaneseq
    %v617 = vshrl.u32 %v616, 7
    %v618 = vsub.s32 0, %v617
    %v619 = vrot.slane %v581, %v618
    %v620 = vlaneseq
    %v621 = vshrl.u32 %v620, 7
    %v622 = vsub.s32 1, %v621
    %v623 = vrot.slane %v581, %v622
    %626 = vmatprep.subr.mxu0 0.0
    %627 = vmatpush1.msra.mxu0 %v582
    %628 = vmatprep.subr.mxu0 0.0
    %629 = vmatpush1.msra.mxu0 %v583
    %630 = vmatprep.subr.mxu0 0.0
    %631 = vmatpush1.msra.mxu0 %v584
    %632 = vmatprep.subr.mxu0 0.0
    %633 = vmatpush1.msra.mxu0 %v585
    %634 = vmatprep.subr.mxu0 0.0
    %635 = vmatpush1.msra.mxu0 %v586
    %636 = vmatprep.subr.mxu0 0.0
    %637 = vmatpush1.msra.mxu0 %v587
    %638 = vmatprep.subr.mxu0 0.0
    %639 = vmatpush1.msra.mxu0 %v588
    %640 = vmatprep.subr.mxu0 0.0
    %641 = vmatpush1.msra.mxu0 %v589
    %642 = vmatprep.subr.mxu0 0.0
    %643 = vmatpush1.msra.mxu0 %v590
    %644 = vmatprep.subr.mxu0 0.0
    %645 = vmatpush1.msra.mxu0 %v591
    %646 = vmatprep.subr.mxu0 0.0
    %647 = vmatpush1.msra.mxu0 %v592
    %648 = vmatprep.subr.mxu0 0.0
    %649 = vmatpush1.msra.mxu0 %v593
    %650 = vmatprep.subr.mxu0 0.0
    %651 = vmatpush1.msra.mxu0 %v594
    %652 = vmatprep.subr.mxu0 0.0
    %653 = vmatpush1.msra.mxu0 %v595
    %654 = vmatprep.subr.mxu0 0.0
    %655 = vmatpush1.msra.mxu0 %v596
    %656 = vmatprep.subr.mxu0 0.0
    %657 = vmatpush1.msra.mxu0 %v597
    %658 = vmatprep.subr.mxu0 0.0
    %659 = vmatpush1.msra.mxu0 %v598
    %660 = vmatprep.subr.mxu0 0.0
    %661 = vmatpush1.msra.mxu0 %v599
    %662 = vmatprep.subr.mxu0 0.0
    %663 = vmatpush1.msra.mxu0 %v600
    %664 = vmatprep.subr.mxu0 0.0
    %665 = vmatpush1.msra.mxu0 %v601
    %666 = vmatprep.subr.mxu0 0.0
    %667 = vmatpush1.msra.mxu0 %v602
    %668 = vmatprep.subr.mxu0 0.0
    %669 = vmatpush1.msra.mxu0 %v603
    %670 = vmatprep.subr.mxu0 0.0
    %671 = vmatpush1.msra.mxu0 %v604
    %672 = vmatprep.subr.mxu0 0.0
    %673 = vmatpush1.msra.mxu0 %v605
    %674 = vmatprep.subr.mxu0 0.0
    %675 = vmatpush1.msra.mxu0 %v606
    %676 = vmatprep.subr.mxu0 0.0
    %677 = vmatpush1.msra.mxu0 %v607
    %678 = vmatprep.subr.mxu0 0.0
    %679 = vmatpush1.msra.mxu0 %v608
    %680 = vmatprep.subr.mxu0 0.0
    %681 = vmatpush1.msra.mxu0 %v609
    %682 = vmatprep.subr.mxu0 0.0
    %683 = vmatpush1.msra.mxu0 %v610
    %684 = vmatprep.subr.mxu0 0.0
    %685 = vmatpush1.msra.mxu0 %v611
    %686 = vmatprep.subr.mxu0 0.0
    %687 = vmatpush1.msra.mxu0 %v612
    %688 = vmatprep.subr.mxu0 0.0
    %689 = vmatpush1.msra.mxu0 %v613
    %690 = vmatprep.mubr.f32.mxu0 %v623
    %691 = vmatmul.mubr.f32.gmra.mrb[0].mxu0 %v619
    %v692 = vpop.f32.mrb[0].mxu0
    %v693 = vadd.f32 %v614, %v692
    %v694 = vpop.f32.mrb[0].mxu0
    %695 = vdwg.mxu0
    %696 = vst [vmem:[#allocation10] sm:$0x1] %v693
    // Predicated region
    $region46: #{tpu_custom_call.1} parent=1 // pred_check
      _
    $region47: #{tpu_custom_call.1} parent=1 // pred_check_branch
      %698 = sbr.rel (0) target = $region49
    $region48: #{tpu_custom_call.1} parent=1 // pred_region
      %s700 = ssub.s32 16, 16
      %701 = vsyncadd [#allocation4], %s700
      %s703 = sshll.u32 [#allocation10], 4
      %s704 = int_to_ptr.vmem [resolvable:$true] %s703
      %706 = dma.vmem_to_hbm [thread:$0]  %s704, 16, %s7, [#allocation4]
    $region49: #{tpu_custom_call.1} parent=1 // pred_fallthru
      _
    // Predicated region
    $region50: #{tpu_custom_call.1} parent=1 // pred_check
      _
    $region51: #{tpu_custom_call.1} parent=1 // pred_check_branch
      %708 = sbr.rel (0) target = $region53
    $region52: #{tpu_custom_call.1} parent=1 // pred_region
      %709 = dma.done [#allocation4], 16
    $region53: #{tpu_custom_call.1} parent=1 // pred_fallthru
      _
    %710 = vsyncpa [#allocation3], 1
    %711 = vsyncpa [#allocation6], 1
    %712 = vsyncpa [#allocation9], 1
    %713 = vsyncpa [#allocation4], 1

</llo_original>
